<compile_context>
chip_gen: v7x
topology: tpu7x:2x2x1
jax: 0.10.0
libtpu: 0.0.40
codegen_flags: <defaults>
</compile_context>

<pallas_src>
import functools

import jax
import jax.numpy as jnp
from jax.experimental import pallas as pl
from jax.experimental.pallas import tpu as pltpu


def _encoder_kernel(x_ref,
                    w1_ref, b1_ref, w2_ref, b2_ref,
                    w3_ref, b3_ref, w4_ref, b4_ref,
                    out_ref, *, pack, state_dim, hidden_dim):
    """One tile of packed batch rows.

    x_ref   : [T, pack*S]  f32  (pack consecutive logical rows per packed row)
    w*_ref  : block-diagonal packed weights (bf16, VMEM-resident):
              w1 [pack*S, pack*H], w2..w4 [pack*H, pack*H]
    b*_ref  : [1, pack*H]  f32  (per-block tiled biases)
    out_ref : [T, pack*(S+H)]   interleaved [x_r | h_r] blocks, one per logical row
    """
    S, H, P = state_dim, hidden_dim, pack
    O = S + H

    x = x_ref[...]                          # f32; kept exact for the passthrough
    h = x.astype(w1_ref.dtype)              # bf16 MXU operand
    hf = None
    for w_ref, b_ref in ((w1_ref, b1_ref), (w2_ref, b2_ref),
                         (w3_ref, b3_ref), (w4_ref, b4_ref)):
        acc = jnp.dot(h, w_ref[...], preferred_element_type=jnp.float32)
        hf = jnp.tanh(acc + b_ref[...])     # f32 epilogue (v5e has no bf16 VPU/EUP)
        h = hf.astype(w_ref.dtype)

    # Fused concat: logical row r = j*P + k of the final [B, S+H] output lives at
    # lanes [k*O, (k+1)*O) of packed row j, so the wrapper reshape back is free.
    for k in range(P):
        out_ref[:, k * O:k * O + S] = x[:, k * S:(k + 1) * S].astype(out_ref.dtype)
        out_ref[:, k * O + S:(k + 1) * O] = (
            hf[:, k * H:(k + 1) * H].astype(out_ref.dtype))


def encoder_forward(x, params, *, pack=8, tile_rows=2048):
    """Encoder forward pass: concat([x, MLP(x)], axis=-1).

    x      : [B, state_dim] f32
    params : dict w1..w4 ([in, out] layout, f32), b1..b4 ([1, out], f32)
    """
    B, S = x.shape
    H = params["w1"].shape[1]
    O = S + H

    # Pad the batch to a multiple of the pack factor (tail rows discarded below).
    B_pad = ((B + pack - 1) // pack) * pack
    x_in = x if B_pad == B else jnp.concatenate(
        [x, jnp.zeros((B_pad - B, S), x.dtype)], axis=0)
    rows = B_pad // pack
    xp = x_in.reshape(rows, pack * S)                 # free row-major reshape

    # Block-diagonal packed weights (bf16 MXU operands) + per-block tiled biases.
    wdt = jnp.bfloat16
    eye = jnp.eye(pack, dtype=wdt)
    w_bd = [jnp.kron(eye, params[f"w{i}"].astype(wdt)) for i in range(1, 5)]
    b_tl = [jnp.tile(params[f"b{i}"].astype(jnp.float32), (1, pack))
            for i in range(1, 5)]

    if rows <= tile_rows:
        tile_rows = rows                              # single block == full batch
    else:
        tile_rows = max(8, (tile_rows // 8) * 8)      # sublane-aligned tile
    grid = (pl.cdiv(rows, tile_rows),)

    x_spec = pl.BlockSpec((tile_rows, pack * S), lambda i: (i, 0))
    o_spec = pl.BlockSpec((tile_rows, pack * O), lambda i: (i, 0))
    # Weights / biases: same block every grid step -> loaded once, VMEM-resident.
    resident = lambda shape: pl.BlockSpec(shape, lambda i: (0, 0))

    kernel = functools.partial(_encoder_kernel, pack=pack,
                               state_dim=S, hidden_dim=H)

    out_p = pl.pallas_call(
        kernel,
        out_shape=jax.ShapeDtypeStruct((rows, pack * O), x.dtype),
        grid=grid,
        in_specs=[
            x_spec,
            resident((pack * S, pack * H)), resident((1, pack * H)),
            resident((pack * H, pack * H)), resident((1, pack * H)),
            resident((pack * H, pack * H)), resident((1, pack * H)),
            resident((pack * H, pack * H)), resident((1, pack * H)),
        ],
        out_specs=o_spec,
        compiler_params=pltpu.CompilerParams(
            dimension_semantics=("parallel",),   # v7x: shard batch tiles over 2 TCs
        ),
    )(xp, w_bd[0], b_tl[0], w_bd[1], b_tl[1],
      w_bd[2], b_tl[2], w_bd[3], b_tl[3])

    out = out_p.reshape(B_pad, O)                # free reshape back to [B_pad, S+H]
    return out if B_pad == B else out[:B]


def init_encoder_params(key, state_dim, hidden_dim, dtype=jnp.float32):
    """nn.Linear-style init; weights stored transposed as [in, out]."""
    keys = jax.random.split(key, 8)
    dims = [(state_dim, hidden_dim),
            (hidden_dim, hidden_dim),
            (hidden_dim, hidden_dim),
            (hidden_dim, hidden_dim)]
    params = {}
    for i, (fan_in, fan_out) in enumerate(dims, start=1):
        bound = 1.0 / float(fan_in) ** 0.5
        params[f"w{i}"] = jax.random.uniform(
            keys[2 * (i - 1)], (fan_in, fan_out), dtype, -bound, bound)
        params[f"b{i}"] = jax.random.uniform(
            keys[2 * (i - 1) + 1], (1, fan_out), dtype, -bound, bound)
    return params


def encoder_reference(x, params):
    """Pure-JAX f32 reference for correctness checking."""
    h = x
    for i in range(1, 5):
        h = jnp.tanh(h @ params[f"w{i}"] + params[f"b{i}"])
    return jnp.concatenate([x, h], axis=-1)


if __name__ == "__main__":
    state_dim = 16
    hidden_dim = 32

    key = jax.random.PRNGKey(0)
    k_params, k_x1, k_x2 = jax.random.split(key, 3)
    params = init_encoder_params(k_params, state_dim, hidden_dim)

    # (a) Small batch that is NOT a multiple of the pack factor (padding path,
    #     single grid step).
    x_small = jax.random.normal(k_x1, (10, state_dim), dtype=jnp.float32)
    out_small = jax.block_until_ready(encoder_forward(x_small, params))
    ref_small = encoder_reference(x_small, params)
    assert out_small.shape == (10, state_dim + hidden_dim), out_small.shape
    assert bool(jnp.array_equal(out_small[:, :state_dim], x_small)), \
        "x passthrough not exact (small batch)"
    assert bool(jnp.allclose(out_small, ref_small, atol=5e-2, rtol=0.0)), \
        "small-batch mismatch vs f32 reference (bf16 matmul tolerance)"

    # (b) Multi-step grid (batch tiled; weights stay VMEM-resident across steps).
    x_big = jax.random.normal(k_x2, (256, state_dim), dtype=jnp.float32)
    out_big = jax.block_until_ready(encoder_forward(x_big, params, tile_rows=8))
    ref_big = encoder_reference(x_big, params)
    assert out_big.shape == (256, state_dim + hidden_dim), out_big.shape
    assert bool(jnp.array_equal(out_big[:, :state_dim], x_big)), \
        "x passthrough not exact (tiled batch)"
    assert bool(jnp.allclose(out_big, ref_big, atol=5e-2, rtol=0.0)), \
        "tiled-batch mismatch vs f32 reference (bf16 matmul tolerance)"

    print("KERNEL_OK")
</pallas_src>

<mosaic_0001>
module attributes {stable_mosaic.version = 11 : i64} {
  func.func @_encoder_kernel(%arg0: i32, %arg1: memref<2x128xf32, #tpu.memory_space<vmem>>, %arg2: memref<128x256xbf16, #tpu.memory_space<vmem>>, %arg3: memref<1x256xf32, #tpu.memory_space<vmem>>, %arg4: memref<256x256xbf16, #tpu.memory_space<vmem>>, %arg5: memref<1x256xf32, #tpu.memory_space<vmem>>, %arg6: memref<256x256xbf16, #tpu.memory_space<vmem>>, %arg7: memref<1x256xf32, #tpu.memory_space<vmem>>, %arg8: memref<256x256xbf16, #tpu.memory_space<vmem>>, %arg9: memref<1x256xf32, #tpu.memory_space<vmem>>, %arg10: memref<2x384xf32, #tpu.memory_space<vmem>>) attributes {dimension_semantics = [#tpu.dimension_semantics<parallel>], iteration_bounds = array<i64: 1>, scalar_prefetch = 0 : i64, scratch_operands = 0 : i64, tpu.core_type = #tpu.core_type<tc>, window_params = [{transform_indices = @transform_0, window_bounds = array<i64: 2, 128>}, {pipeline_mode = #tpu.pipeline_mode<synchronous>, transform_indices = @transform_1, window_bounds = array<i64: 128, 256>}, {pipeline_mode = #tpu.pipeline_mode<synchronous>, transform_indices = @transform_2, window_bounds = array<i64: 1, 256>}, {pipeline_mode = #tpu.pipeline_mode<synchronous>, transform_indices = @transform_3, window_bounds = array<i64: 256, 256>}, {pipeline_mode = #tpu.pipeline_mode<synchronous>, transform_indices = @transform_4, window_bounds = array<i64: 1, 256>}, {pipeline_mode = #tpu.pipeline_mode<synchronous>, transform_indices = @transform_5, window_bounds = array<i64: 256, 256>}, {pipeline_mode = #tpu.pipeline_mode<synchronous>, transform_indices = @transform_6, window_bounds = array<i64: 1, 256>}, {pipeline_mode = #tpu.pipeline_mode<synchronous>, transform_indices = @transform_7, window_bounds = array<i64: 256, 256>}, {pipeline_mode = #tpu.pipeline_mode<synchronous>, transform_indices = @transform_8, window_bounds = array<i64: 1, 256>}, {transform_indices = @transform_9, window_bounds = array<i64: 2, 384>}]} {
    %c0 = arith.constant 0 : index
    %c0_0 = arith.constant 0 : index
    %0 = vector.load %arg1[%c0, %c0_0] : memref<2x128xf32, #tpu.memory_space<vmem>>, vector<2x128xf32>
    %1 = arith.truncf %0 : vector<2x128xf32> to vector<2x128xbf16>
    %c0_1 = arith.constant 0 : index
    %c0_2 = arith.constant 0 : index
    %2 = vector.load %arg2[%c0_1, %c0_2] : memref<128x256xbf16, #tpu.memory_space<vmem>>, vector<128x256xbf16>
    %cst = arith.constant dense<0.000000e+00> : vector<2x256xf32>
    %3 = tpu.matmul %1, %2, %cst {dimension_numbers = #tpu.dot_dimension_numbers<[1], [0], [0], [1], [0, 0, 1, 1], [], []>} : vector<2x128xbf16>, vector<128x256xbf16>, vector<2x256xf32> -> vector<2x256xf32>
    %c0_3 = arith.constant 0 : index
    %c0_4 = arith.constant 0 : index
    %4 = vector.load %arg3[%c0_3, %c0_4] : memref<1x256xf32, #tpu.memory_space<vmem>>, vector<1x256xf32>
    %5 = vector.broadcast %4 : vector<1x256xf32> to vector<2x256xf32>
    %6 = arith.addf %3, %5 : vector<2x256xf32>
    %7 = math.tanh %6 : vector<2x256xf32>
    %8 = arith.truncf %7 : vector<2x256xf32> to vector<2x256xbf16>
    %c0_5 = arith.constant 0 : index
    %c0_6 = arith.constant 0 : index
    %9 = vector.load %arg4[%c0_5, %c0_6] : memref<256x256xbf16, #tpu.memory_space<vmem>>, vector<256x256xbf16>
    %cst_7 = arith.constant dense<0.000000e+00> : vector<2x256xf32>
    %10 = tpu.matmul %8, %9, %cst_7 {dimension_numbers = #tpu.dot_dimension_numbers<[1], [0], [0], [1], [0, 0, 1, 1], [], []>} : vector<2x256xbf16>, vector<256x256xbf16>, vector<2x256xf32> -> vector<2x256xf32>
    %c0_8 = arith.constant 0 : index
    %c0_9 = arith.constant 0 : index
    %11 = vector.load %arg5[%c0_8, %c0_9] : memref<1x256xf32, #tpu.memory_space<vmem>>, vector<1x256xf32>
    %12 = vector.broadcast %11 : vector<1x256xf32> to vector<2x256xf32>
    %13 = arith.addf %10, %12 : vector<2x256xf32>
    %14 = math.tanh %13 : vector<2x256xf32>
    %15 = arith.truncf %14 : vector<2x256xf32> to vector<2x256xbf16>
    %c0_10 = arith.constant 0 : index
    %c0_11 = arith.constant 0 : index
    %16 = vector.load %arg6[%c0_10, %c0_11] : memref<256x256xbf16, #tpu.memory_space<vmem>>, vector<256x256xbf16>
    %cst_12 = arith.constant dense<0.000000e+00> : vector<2x256xf32>
    %17 = tpu.matmul %15, %16, %cst_12 {dimension_numbers = #tpu.dot_dimension_numbers<[1], [0], [0], [1], [0, 0, 1, 1], [], []>} : vector<2x256xbf16>, vector<256x256xbf16>, vector<2x256xf32> -> vector<2x256xf32>
    %c0_13 = arith.constant 0 : index
    %c0_14 = arith.constant 0 : index
    %18 = vector.load %arg7[%c0_13, %c0_14] : memref<1x256xf32, #tpu.memory_space<vmem>>, vector<1x256xf32>
    %19 = vector.broadcast %18 : vector<1x256xf32> to vector<2x256xf32>
    %20 = arith.addf %17, %19 : vector<2x256xf32>
    %21 = math.tanh %20 : vector<2x256xf32>
    %22 = arith.truncf %21 : vector<2x256xf32> to vector<2x256xbf16>
    %c0_15 = arith.constant 0 : index
    %c0_16 = arith.constant 0 : index
    %23 = vector.load %arg8[%c0_15, %c0_16] : memref<256x256xbf16, #tpu.memory_space<vmem>>, vector<256x256xbf16>
    %cst_17 = arith.constant dense<0.000000e+00> : vector<2x256xf32>
    %24 = tpu.matmul %22, %23, %cst_17 {dimension_numbers = #tpu.dot_dimension_numbers<[1], [0], [0], [1], [0, 0, 1, 1], [], []>} : vector<2x256xbf16>, vector<256x256xbf16>, vector<2x256xf32> -> vector<2x256xf32>
    %c0_18 = arith.constant 0 : index
    %c0_19 = arith.constant 0 : index
    %25 = vector.load %arg9[%c0_18, %c0_19] : memref<1x256xf32, #tpu.memory_space<vmem>>, vector<1x256xf32>
    %26 = vector.broadcast %25 : vector<1x256xf32> to vector<2x256xf32>
    %27 = arith.addf %24, %26 : vector<2x256xf32>
    %28 = math.tanh %27 : vector<2x256xf32>
    %29 = vector.extract_strided_slice %0 {offsets = [0, 0], sizes = [2, 16], strides = [1, 1]} : vector<2x128xf32> to vector<2x16xf32>
    %c0_20 = arith.constant 0 : index
    %c0_21 = arith.constant 0 : index
    %30 = vector.load %arg10[%c0_20, %c0_21] : memref<2x384xf32, #tpu.memory_space<vmem>>, vector<2x16xf32>
    tpu.vector_store %arg10[%c0_20, %c0_21], %29 {strides = array<i32>} : memref<2x384xf32, #tpu.memory_space<vmem>>, vector<2x16xf32>,
    %31 = vector.extract_strided_slice %28 {offsets = [0, 0], sizes = [2, 32], strides = [1, 1]} : vector<2x256xf32> to vector<2x32xf32>
    %c0_22 = arith.constant 0 : index
    %c16 = arith.constant 16 : index
    %32 = vector.load %arg10[%c0_22, %c16] : memref<2x384xf32, #tpu.memory_space<vmem>>, vector<2x32xf32>
    tpu.vector_store %arg10[%c0_22, %c16], %31 {strides = array<i32>} : memref<2x384xf32, #tpu.memory_space<vmem>>, vector<2x32xf32>,
    %33 = vector.extract_strided_slice %0 {offsets = [0, 16], sizes = [2, 16], strides = [1, 1]} : vector<2x128xf32> to vector<2x16xf32>
    %c0_23 = arith.constant 0 : index
    %c48 = arith.constant 48 : index
    %34 = vector.load %arg10[%c0_23, %c48] : memref<2x384xf32, #tpu.memory_space<vmem>>, vector<2x16xf32>
    tpu.vector_store %arg10[%c0_23, %c48], %33 {strides = array<i32>} : memref<2x384xf32, #tpu.memory_space<vmem>>, vector<2x16xf32>,
    %35 = vector.extract_strided_slice %28 {offsets = [0, 32], sizes = [2, 32], strides = [1, 1]} : vector<2x256xf32> to vector<2x32xf32>
    %c0_24 = arith.constant 0 : index
    %c64 = arith.constant 64 : index
    %36 = vector.load %arg10[%c0_24, %c64] : memref<2x384xf32, #tpu.memory_space<vmem>>, vector<2x32xf32>
    tpu.vector_store %arg10[%c0_24, %c64], %35 {strides = array<i32>} : memref<2x384xf32, #tpu.memory_space<vmem>>, vector<2x32xf32>,
    %37 = vector.extract_strided_slice %0 {offsets = [0, 32], sizes = [2, 16], strides = [1, 1]} : vector<2x128xf32> to vector<2x16xf32>
    %c0_25 = arith.constant 0 : index
    %c96 = arith.constant 96 : index
    %38 = vector.load %arg10[%c0_25, %c96] : memref<2x384xf32, #tpu.memory_space<vmem>>, vector<2x16xf32>
    tpu.vector_store %arg10[%c0_25, %c96], %37 {strides = array<i32>} : memref<2x384xf32, #tpu.memory_space<vmem>>, vector<2x16xf32>,
    %39 = vector.extract_strided_slice %28 {offsets = [0, 64], sizes = [2, 32], strides = [1, 1]} : vector<2x256xf32> to vector<2x32xf32>
    %c0_26 = arith.constant 0 : index
    %c112 = arith.constant 112 : index
    %40 = vector.load %arg10[%c0_26, %c112] : memref<2x384xf32, #tpu.memory_space<vmem>>, vector<2x32xf32>
    tpu.vector_store %arg10[%c0_26, %c112], %39 {strides = array<i32>} : memref<2x384xf32, #tpu.memory_space<vmem>>, vector<2x32xf32>,
    %41 = vector.extract_strided_slice %0 {offsets = [0, 48], sizes = [2, 16], strides = [1, 1]} : vector<2x128xf32> to vector<2x16xf32>
    %c0_27 = arith.constant 0 : index
    %c144 = arith.constant 144 : index
    %42 = vector.load %arg10[%c0_27, %c144] : memref<2x384xf32, #tpu.memory_space<vmem>>, vector<2x16xf32>
    tpu.vector_store %arg10[%c0_27, %c144], %41 {strides = array<i32>} : memref<2x384xf32, #tpu.memory_space<vmem>>, vector<2x16xf32>,
    %43 = vector.extract_strided_slice %28 {offsets = [0, 96], sizes = [2, 32], strides = [1, 1]} : vector<2x256xf32> to vector<2x32xf32>
    %c0_28 = arith.constant 0 : index
    %c160 = arith.constant 160 : index
    %44 = vector.load %arg10[%c0_28, %c160] : memref<2x384xf32, #tpu.memory_space<vmem>>, vector<2x32xf32>
    tpu.vector_store %arg10[%c0_28, %c160], %43 {strides = array<i32>} : memref<2x384xf32, #tpu.memory_space<vmem>>, vector<2x32xf32>,
    %45 = vector.extract_strided_slice %0 {offsets = [0, 64], sizes = [2, 16], strides = [1, 1]} : vector<2x128xf32> to vector<2x16xf32>
    %c0_29 = arith.constant 0 : index
    %c192 = arith.constant 192 : index
    %46 = vector.load %arg10[%c0_29, %c192] : memref<2x384xf32, #tpu.memory_space<vmem>>, vector<2x16xf32>
    tpu.vector_store %arg10[%c0_29, %c192], %45 {strides = array<i32>} : memref<2x384xf32, #tpu.memory_space<vmem>>, vector<2x16xf32>,
    %47 = vector.extract_strided_slice %28 {offsets = [0, 128], sizes = [2, 32], strides = [1, 1]} : vector<2x256xf32> to vector<2x32xf32>
    %c0_30 = arith.constant 0 : index
    %c208 = arith.constant 208 : index
    %48 = vector.load %arg10[%c0_30, %c208] : memref<2x384xf32, #tpu.memory_space<vmem>>, vector<2x32xf32>
    tpu.vector_store %arg10[%c0_30, %c208], %47 {strides = array<i32>} : memref<2x384xf32, #tpu.memory_space<vmem>>, vector<2x32xf32>,
    %49 = vector.extract_strided_slice %0 {offsets = [0, 80], sizes = [2, 16], strides = [1, 1]} : vector<2x128xf32> to vector<2x16xf32>
    %c0_31 = arith.constant 0 : index
    %c240 = arith.constant 240 : index
    %50 = vector.load %arg10[%c0_31, %c240] : memref<2x384xf32, #tpu.memory_space<vmem>>, vector<2x16xf32>
    tpu.vector_store %arg10[%c0_31, %c240], %49 {strides = array<i32>} : memref<2x384xf32, #tpu.memory_space<vmem>>, vector<2x16xf32>,
    %51 = vector.extract_strided_slice %28 {offsets = [0, 160], sizes = [2, 32], strides = [1, 1]} : vector<2x256xf32> to vector<2x32xf32>
    %c0_32 = arith.constant 0 : index
    %c256 = arith.constant 256 : index
    %52 = vector.load %arg10[%c0_32, %c256] : memref<2x384xf32, #tpu.memory_space<vmem>>, vector<2x32xf32>
    tpu.vector_store %arg10[%c0_32, %c256], %51 {strides = array<i32>} : memref<2x384xf32, #tpu.memory_space<vmem>>, vector<2x32xf32>,
    %53 = vector.extract_strided_slice %0 {offsets = [0, 96], sizes = [2, 16], strides = [1, 1]} : vector<2x128xf32> to vector<2x16xf32>
    %c0_33 = arith.constant 0 : index
    %c288 = arith.constant 288 : index
    %54 = vector.load %arg10[%c0_33, %c288] : memref<2x384xf32, #tpu.memory_space<vmem>>, vector<2x16xf32>
    tpu.vector_store %arg10[%c0_33, %c288], %53 {strides = array<i32>} : memref<2x384xf32, #tpu.memory_space<vmem>>, vector<2x16xf32>,
    %55 = vector.extract_strided_slice %28 {offsets = [0, 192], sizes = [2, 32], strides = [1, 1]} : vector<2x256xf32> to vector<2x32xf32>
    %c0_34 = arith.constant 0 : index
    %c304 = arith.constant 304 : index
    %56 = vector.load %arg10[%c0_34, %c304] : memref<2x384xf32, #tpu.memory_space<vmem>>, vector<2x32xf32>
    tpu.vector_store %arg10[%c0_34, %c304], %55 {strides = array<i32>} : memref<2x384xf32, #tpu.memory_space<vmem>>, vector<2x32xf32>,
    %57 = vector.extract_strided_slice %0 {offsets = [0, 112], sizes = [2, 16], strides = [1, 1]} : vector<2x128xf32> to vector<2x16xf32>
    %c0_35 = arith.constant 0 : index
    %c336 = arith.constant 336 : index
    %58 = vector.load %arg10[%c0_35, %c336] : memref<2x384xf32, #tpu.memory_space<vmem>>, vector<2x16xf32>
    tpu.vector_store %arg10[%c0_35, %c336], %57 {strides = array<i32>} : memref<2x384xf32, #tpu.memory_space<vmem>>, vector<2x16xf32>,
    %59 = vector.extract_strided_slice %28 {offsets = [0, 224], sizes = [2, 32], strides = [1, 1]} : vector<2x256xf32> to vector<2x32xf32>
    %c0_36 = arith.constant 0 : index
    %c352 = arith.constant 352 : index
    %60 = vector.load %arg10[%c0_36, %c352] : memref<2x384xf32, #tpu.memory_space<vmem>>, vector<2x32xf32>
    tpu.vector_store %arg10[%c0_36, %c352], %59 {strides = array<i32>} : memref<2x384xf32, #tpu.memory_space<vmem>>, vector<2x32xf32>,
    return
  }
  func.func @transform_0(%arg0: i32) -> (i32, i32) {
    %c0_i32 = arith.constant 0 : i32
    %c0_i32_0 = arith.constant 0 : i32
    return %arg0, %c0_i32 : i32, i32
  }
  func.func @transform_1(%arg0: i32) -> (i32, i32) {
    %c0_i32 = arith.constant 0 : i32
    %c0_i32_0 = arith.constant 0 : i32
    %c0_i32_1 = arith.constant 0 : i32
    return %c0_i32, %c0_i32_0 : i32, i32
  }
  func.func @transform_2(%arg0: i32) -> (i32, i32) {
    %c0_i32 = arith.constant 0 : i32
    %c0_i32_0 = arith.constant 0 : i32
    %c0_i32_1 = arith.constant 0 : i32
    return %c0_i32, %c0_i32_0 : i32, i32
  }
  func.func @transform_3(%arg0: i32) -> (i32, i32) {
    %c0_i32 = arith.constant 0 : i32
    %c0_i32_0 = arith.constant 0 : i32
    %c0_i32_1 = arith.constant 0 : i32
    return %c0_i32, %c0_i32_0 : i32, i32
  }
  func.func @transform_4(%arg0: i32) -> (i32, i32) {
    %c0_i32 = arith.constant 0 : i32
    %c0_i32_0 = arith.constant 0 : i32
    %c0_i32_1 = arith.constant 0 : i32
    return %c0_i32, %c0_i32_0 : i32, i32
  }
  func.func @transform_5(%arg0: i32) -> (i32, i32) {
    %c0_i32 = arith.constant 0 : i32
    %c0_i32_0 = arith.constant 0 : i32
    %c0_i32_1 = arith.constant 0 : i32
    return %c0_i32, %c0_i32_0 : i32, i32
  }
  func.func @transform_6(%arg0: i32) -> (i32, i32) {
    %c0_i32 = arith.constant 0 : i32
    %c0_i32_0 = arith.constant 0 : i32
    %c0_i32_1 = arith.constant 0 : i32
    return %c0_i32, %c0_i32_0 : i32, i32
  }
  func.func @transform_7(%arg0: i32) -> (i32, i32) {
    %c0_i32 = arith.constant 0 : i32
    %c0_i32_0 = arith.constant 0 : i32
    %c0_i32_1 = arith.constant 0 : i32
    return %c0_i32, %c0_i32_0 : i32, i32
  }
  func.func @transform_8(%arg0: i32) -> (i32, i32) {
    %c0_i32 = arith.constant 0 : i32
    %c0_i32_0 = arith.constant 0 : i32
    %c0_i32_1 = arith.constant 0 : i32
    return %c0_i32, %c0_i32_0 : i32, i32
  }
  func.func @transform_9(%arg0: i32) -> (i32, i32) {
    %c0_i32 = arith.constant 0 : i32
    %c0_i32_0 = arith.constant 0 : i32
    return %arg0, %c0_i32 : i32, i32
  }
}

</mosaic_0001>

<llo_original>
// kernel: tpu_custom_call.1
$region0: #{tpu_custom_call.1}
  #allocation0 [shape = 'u32[]', space=smem, size = 0x4, offset = 0x4, fixed_abs, tag = 'smem constant byte address 0x4 - core index']
  #allocation1 [shape = 'u32[144,128]{1,0:T(1,128)}', space=vmem, size = 0x12000, scoped, tag = 'internal scratch']
  %s0 = inlined_call_operand.hbm [shape: f32[2,128], index: 0, kind: input, shape index: {}]
  %s1 = inlined_call_operand.hbm [shape: bf16[128,256], index: 1, kind: input, shape index: {}]
  %s2 = inlined_call_operand.vmem [shape: f32[1,256], index: 2, kind: input, shape index: {}]
  %s3 = inlined_call_operand.hbm [shape: bf16[256,256], index: 3, kind: input, shape index: {}]
  %s4 = inlined_call_operand.vmem [shape: f32[1,256], index: 4, kind: input, shape index: {}]
  %s5 = inlined_call_operand.hbm [shape: bf16[256,256], index: 5, kind: input, shape index: {}]
  %s6 = inlined_call_operand.vmem [shape: f32[1,256], index: 6, kind: input, shape index: {}]
  %s7 = inlined_call_operand.hbm [shape: bf16[256,256], index: 7, kind: input, shape index: {}]
  %s8 = inlined_call_operand.vmem [shape: f32[1,256], index: 8, kind: input, shape index: {}]
  %s9 = inlined_call_operand.hbm [shape: f32[2,384], index: 9, kind: output, shape index: {}]
  %s10 = sld [smem:[#allocation0]]
  $region66: #{tpu_custom_call.1} parent=0
    _
  %s12 = ssub.s32 1, %s10
  %s13 = scalar_select 0, %s12, %s10
  $region1: #{tpu_custom_call.1} parent=0
    #allocation2 [shape = 'u8[1024]{0}', space=vmem, size = 0x400, scoped, tag = 'input window, operand 0, single buffered']
    #allocation3 [shape = 's32[1]{0}', space=sflag, size = 0x4, scoped, tag = 'scoped memory for tpu_custom_call.1']
    #allocation4 [shape = 's32[1]{0}', space=sflag, size = 0x4, scoped, tag = 'scoped memory for tpu_custom_call.1']
    #allocation5 [shape = 'u8[65536]{0}', space=vmem, size = 0x10000, scoped, tag = 'input window, operand 1, single buffered']
    #allocation6 [shape = 's32[1]{0}', space=sflag, size = 0x4, scoped, tag = 'scoped memory for tpu_custom_call.1']
    #allocation7 [shape = 'u8[131072]{0}', space=vmem, size = 0x20000, scoped, tag = 'input window, operand 3, single buffered']
    #allocation8 [shape = 'u8[131072]{0}', space=vmem, size = 0x20000, scoped, tag = 'input window, operand 5, single buffered']
    #allocation9 [shape = 's32[1]{0}', space=sflag, size = 0x4, scoped, tag = 'scoped memory for tpu_custom_call.1']
    #allocation10 [shape = 'u8[131072]{0}', space=vmem, size = 0x20000, scoped, tag = 'input window, operand 7, single buffered']
    #allocation11 [shape = 'u8[3072]{0}', space=vmem, size = 0xc00, scoped, tag = 'output window, operand 0, single buffered']
    %14 = vsyncpa [#allocation3], 0
    %15 = vsyncpa [#allocation6], 0
    %16 = vsyncpa [#allocation9], 0
    %17 = vsyncpa [#allocation4], 0
    // Predicated region
    $region2: #{tpu_custom_call.1} parent=1 // pred_check
      _
    $region3: #{tpu_custom_call.1} parent=1 // pred_check_branch
      %19 = sbr.rel (0) target = $region5
    $region4: #{tpu_custom_call.1} parent=1 // pred_region
      %s21 = ssub.s32 32, 32
      %22 = vsyncadd [#allocation3], %s21
      %s24 = sshll.u32 [#allocation2], 4
      %s25 = int_to_ptr.vmem [resolvable:$true] %s24
      %27 = dma.hbm_to_vmem [thread:$0]  %s0, 32, %s25, [#allocation3]
    $region5: #{tpu_custom_call.1} parent=1 // pred_fallthru
      _
    // Predicated region
    $region6: #{tpu_custom_call.1} parent=1 // pred_check
      _
    $region7: #{tpu_custom_call.1} parent=1 // pred_check_branch
      %29 = sbr.rel (0) target = $region9
    $region8: #{tpu_custom_call.1} parent=1 // pred_region
      %s31 = ssub.s32 2048, 2048
      %32 = vsyncadd [#allocation6], %s31
      %s33 = sshll.u32 [#allocation5], 4
      %s34 = int_to_ptr.vmem [resolvable:$true] %s33
      %39 = dma.hbm_to_vmem [thread:$0]  %s1, 2048, %s34, [#allocation6], 128, 128, 8
    $region9: #{tpu_custom_call.1} parent=1 // pred_fallthru
      _
    // Predicated region
    $region10: #{tpu_custom_call.1} parent=1 // pred_check
      _
    $region11: #{tpu_custom_call.1} parent=1 // pred_check_branch
      %41 = sbr.rel (0) target = $region13
    $region12: #{tpu_custom_call.1} parent=1 // pred_region
      _
    $region13: #{tpu_custom_call.1} parent=1 // pred_fallthru
      _
    // Predicated region
    $region14: #{tpu_custom_call.1} parent=1 // pred_check
      _
    $region15: #{tpu_custom_call.1} parent=1 // pred_check_branch
      %43 = sbr.rel (0) target = $region17
    $region16: #{tpu_custom_call.1} parent=1 // pred_region
      %s45 = ssub.s32 4096, 4096
      %46 = vsyncadd [#allocation6], %s45
      %s47 = sshll.u32 [#allocation7], 4
      %s48 = int_to_ptr.vmem [resolvable:$true] %s47
      %53 = dma.hbm_to_vmem [thread:$0]  %s3, 4096, %s48, [#allocation6], 128, 128, 8
    $region17: #{tpu_custom_call.1} parent=1 // pred_fallthru
      _
    // Predicated region
    $region18: #{tpu_custom_call.1} parent=1 // pred_check
      _
    $region19: #{tpu_custom_call.1} parent=1 // pred_check_branch
      %55 = sbr.rel (0) target = $region21
    $region20: #{tpu_custom_call.1} parent=1 // pred_region
      _
    $region21: #{tpu_custom_call.1} parent=1 // pred_fallthru
      _
    // Predicated region
    $region22: #{tpu_custom_call.1} parent=1 // pred_check
      _
    $region23: #{tpu_custom_call.1} parent=1 // pred_check_branch
      %57 = sbr.rel (0) target = $region25
    $region24: #{tpu_custom_call.1} parent=1 // pred_region
      %s59 = ssub.s32 4096, 4096
      %60 = vsyncadd [#allocation9], %s59
      %s61 = sshll.u32 [#allocation8], 4
      %s62 = int_to_ptr.vmem [resolvable:$true] %s61
      %67 = dma.hbm_to_vmem [thread:$0]  %s5, 4096, %s62, [#allocation9], 128, 128, 8
    $region25: #{tpu_custom_call.1} parent=1 // pred_fallthru
      _
    // Predicated region
    $region26: #{tpu_custom_call.1} parent=1 // pred_check
      _
    $region27: #{tpu_custom_call.1} parent=1 // pred_check_branch
      %69 = sbr.rel (0) target = $region29
    $region28: #{tpu_custom_call.1} parent=1 // pred_region
      _
    $region29: #{tpu_custom_call.1} parent=1 // pred_fallthru
      _
    // Predicated region
    $region30: #{tpu_custom_call.1} parent=1 // pred_check
      _
    $region31: #{tpu_custom_call.1} parent=1 // pred_check_branch
      %71 = sbr.rel (0) target = $region33
    $region32: #{tpu_custom_call.1} parent=1 // pred_region
      %s73 = ssub.s32 4096, 4096
      %74 = vsyncadd [#allocation9], %s73
      %s75 = sshll.u32 [#allocation10], 4
      %s76 = int_to_ptr.vmem [resolvable:$true] %s75
      %81 = dma.hbm_to_vmem [thread:$0]  %s7, 4096, %s76, [#allocation9], 128, 128, 8
    $region33: #{tpu_custom_call.1} parent=1 // pred_fallthru
      _
    // Predicated region
    $region34: #{tpu_custom_call.1} parent=1 // pred_check
      _
    $region35: #{tpu_custom_call.1} parent=1 // pred_check_branch
      %83 = sbr.rel (0) target = $region37
    $region36: #{tpu_custom_call.1} parent=1 // pred_region
      _
    $region37: #{tpu_custom_call.1} parent=1 // pred_fallthru
      _
    // Predicated region
    $region38: #{tpu_custom_call.1} parent=1 // pred_check
      _
    $region39: #{tpu_custom_call.1} parent=1 // pred_check_branch
      %85 = sbr.rel (0) target = $region41
    $region40: #{tpu_custom_call.1} parent=1 // pred_region
      %86 = dma.done [#allocation3], 32
    $region41: #{tpu_custom_call.1} parent=1 // pred_fallthru
      _
    // Predicated region
    $region42: #{tpu_custom_call.1} parent=1 // pred_check
      _
    $region43: #{tpu_custom_call.1} parent=1 // pred_check_branch
      %88 = sbr.rel (0) target = $region45
    $region44: #{tpu_custom_call.1} parent=1 // pred_region
      %89 = dma.done [#allocation6], 2048
    $region45: #{tpu_custom_call.1} parent=1 // pred_fallthru
      _
    // Predicated region
    $region46: #{tpu_custom_call.1} parent=1 // pred_check
      _
    $region47: #{tpu_custom_call.1} parent=1 // pred_check_branch
      %91 = sbr.rel (0) target = $region49
    $region48: #{tpu_custom_call.1} parent=1 // pred_region
      %92 = dma.done [#allocation6], 4096
    $region49: #{tpu_custom_call.1} parent=1 // pred_fallthru
      _
    // Predicated region
    $region50: #{tpu_custom_call.1} parent=1 // pred_check
      _
    $region51: #{tpu_custom_call.1} parent=1 // pred_check_branch
      %94 = sbr.rel (0) target = $region53
    $region52: #{tpu_custom_call.1} parent=1 // pred_region
      %95 = dma.done [#allocation9], 4096
    $region53: #{tpu_custom_call.1} parent=1 // pred_fallthru
      _
    // Predicated region
    $region54: #{tpu_custom_call.1} parent=1 // pred_check
      _
    $region55: #{tpu_custom_call.1} parent=1 // pred_check_branch
      %97 = sbr.rel (0) target = $region57
    $region56: #{tpu_custom_call.1} parent=1 // pred_region
      %98 = dma.done [#allocation9], 4096
    $region57: #{tpu_custom_call.1} parent=1 // pred_fallthru
      _
    %v100 = vld [vmem:[#allocation2] sm:$0x3]
    %v101 = vpack.c.bf16 %v100, %v100
    %v102 = vld [vmem:[#allocation5] sm:$0xff]
    %v103 = vld [vmem:[#allocation5 + $0x8] sm:$0xff]
    %v104 = vld [vmem:[#allocation5 + $0x10] sm:$0xff]
    %v105 = vld [vmem:[#allocation5 + $0x18] sm:$0xff]
    %v106 = vld [vmem:[#allocation5 + $0x20] sm:$0xff]
    %v107 = vld [vmem:[#allocation5 + $0x28] sm:$0xff]
    %v108 = vld [vmem:[#allocation5 + $0x30] sm:$0xff]
    %v109 = vld [vmem:[#allocation5 + $0x38] sm:$0xff]
    %v110 = vld [vmem:[#allocation5 + $0x40] sm:$0xff]
    %v111 = vld [vmem:[#allocation5 + $0x48] sm:$0xff]
    %v112 = vld [vmem:[#allocation5 + $0x50] sm:$0xff]
    %v113 = vld [vmem:[#allocation5 + $0x58] sm:$0xff]
    %v114 = vld [vmem:[#allocation5 + $0x60] sm:$0xff]
    %v115 = vld [vmem:[#allocation5 + $0x68] sm:$0xff]
    %v116 = vld [vmem:[#allocation5 + $0x70] sm:$0xff]
    %v117 = vld [vmem:[#allocation5 + $0x78] sm:$0xff]
    %v118 = vld [vmem:[%s2] sm:$0x3]
    %v120 = vlaneseq
    %v121 = vshrl.u32 %v120, 7
    %v122 = vsub.s32 0, %v121
    %v123 = vrot.slane %v118, %v122
    %v124 = vlaneseq
    %v125 = vshrl.u32 %v124, 7
    %v126 = vsub.s32 1, %v125
    %v127 = vrot.slane %v118, %v126
    %v146 = vunpack.c.l.b16 %v102
    %v147 = vunpack.c.h.b16 %v102
    %v148 = vunpack.c.l.b16 %v103
    %v149 = vunpack.c.h.b16 %v103
    %v150 = vunpack.c.l.b16 %v104
    %v151 = vunpack.c.h.b16 %v104
    %v152 = vunpack.c.l.b16 %v105
    %v153 = vunpack.c.h.b16 %v105
    %v154 = vunpack.c.l.b16 %v106
    %v155 = vunpack.c.h.b16 %v106
    %v156 = vunpack.c.l.b16 %v107
    %v157 = vunpack.c.h.b16 %v107
    %v158 = vunpack.c.l.b16 %v108
    %v159 = vunpack.c.h.b16 %v108
    %v160 = vunpack.c.l.b16 %v109
    %v161 = vunpack.c.h.b16 %v109
    %v162 = vunpack.c.l.b16 %v110
    %v163 = vunpack.c.h.b16 %v110
    %v164 = vunpack.c.l.b16 %v111
    %v165 = vunpack.c.h.b16 %v111
    %v166 = vunpack.c.l.b16 %v112
    %v167 = vunpack.c.h.b16 %v112
    %v168 = vunpack.c.l.b16 %v113
    %v169 = vunpack.c.h.b16 %v113
    %v170 = vunpack.c.l.b16 %v114
    %v171 = vunpack.c.h.b16 %v114
    %v172 = vunpack.c.l.b16 %v115
    %v173 = vunpack.c.h.b16 %v115
    %v174 = vunpack.c.l.b16 %v116
    %v175 = vunpack.c.h.b16 %v116
    %v176 = vunpack.c.l.b16 %v117
    %v177 = vunpack.c.h.b16 %v117
    %v178 = vpack.c.b16 %v148, %v146
    %v179 = vpack.c.b16 %v149, %v147
    %v180 = vpack.c.b16 %v152, %v150
    %v181 = vpack.c.b16 %v153, %v151
    %v182 = vpack.c.b16 %v156, %v154
    %v183 = vpack.c.b16 %v157, %v155
    %v184 = vpack.c.b16 %v160, %v158
    %v185 = vpack.c.b16 %v161, %v159
    %v186 = vpack.c.b16 %v164, %v162
    %v187 = vpack.c.b16 %v165, %v163
    %v188 = vpack.c.b16 %v168, %v166
    %v189 = vpack.c.b16 %v169, %v167
    %v190 = vpack.c.b16 %v172, %v170
    %v191 = vpack.c.b16 %v173, %v171
    %v192 = vpack.c.b16 %v176, %v174
    %v193 = vpack.c.b16 %v177, %v175
    %210 = vmatprep.subr.bf16.mxu0 %v179
    %211 = vmatpush1.bf16.msra.mxu0 %v178
    %212 = vmatprep.subr.bf16.mxu0 %v181
    %213 = vmatpush1.bf16.msra.mxu0 %v180
    %214 = vmatprep.subr.bf16.mxu0 %v183
    %215 = vmatpush1.bf16.msra.mxu0 %v182
    %216 = vmatprep.subr.bf16.mxu0 %v185
    %217 = vmatpush1.bf16.msra.mxu0 %v184
    %218 = vmatprep.subr.bf16.mxu0 %v187
    %219 = vmatpush1.bf16.msra.mxu0 %v186
    %220 = vmatprep.subr.bf16.mxu0 %v189
    %221 = vmatpush1.bf16.msra.mxu0 %v188
    %222 = vmatprep.subr.bf16.mxu0 %v191
    %223 = vmatpush1.bf16.msra.mxu0 %v190
    %224 = vmatprep.subr.bf16.mxu0 %v193
    %225 = vmatpush1.bf16.msra.mxu0 %v192
    %226 = vmatprep.subr.bf16.mxu0 0
    %227 = vmatpush1.bf16.msra.mxu0 0
    %228 = vmatprep.subr.bf16.mxu0 0
    %229 = vmatpush1.bf16.msra.mxu0 0
    %230 = vmatprep.subr.bf16.mxu0 0
    %231 = vmatpush1.bf16.msra.mxu0 0
    %232 = vmatprep.subr.bf16.mxu0 0
    %233 = vmatpush1.bf16.msra.mxu0 0
    %234 = vmatprep.subr.bf16.mxu0 0
    %235 = vmatpush1.bf16.msra.mxu0 0
    %236 = vmatprep.subr.bf16.mxu0 0
    %237 = vmatpush1.bf16.msra.mxu0 0
    %238 = vmatprep.subr.bf16.mxu0 0
    %239 = vmatpush1.bf16.msra.mxu0 0
    %240 = vmatprep.subr.bf16.mxu0 0
    %241 = vmatpush1.bf16.msra.mxu0 0
    %242 = vmatprep.mubr.bf16.mxu0 0
    %243 = vmatmul.mubr.bf16.gmra.mrb[0].mxu0 %v101
    %v244 = vpop.f32.mrb[0].mxu0
    %v245 = vadd.f32 %v123, %v244
    %v246 = vpop.f32.mrb[0].mxu0
    %v247 = vadd.f32 %v127, %v246
    %v248 = vpop.f32.mrb[0].mxu0
    %v249 = vpop.f32.mrb[0].mxu0
    %250 = vdwg.mxu0
    %v251 = vtanh.pop %v245
    %v252 = vtanh.pop %v247
    %v253 = vpack.c.bf16 %v251, %v251
    %v254 = vpack.c.bf16 %v252, %v252
    %v255 = vld [vmem:[#allocation7] sm:$0xff]
    %v256 = vld [vmem:[#allocation7 + $0x8] sm:$0xff]
    %v257 = vld [vmem:[#allocation7 + $0x10] sm:$0xff]
    %v258 = vld [vmem:[#allocation7 + $0x18] sm:$0xff]
    %v259 = vld [vmem:[#allocation7 + $0x20] sm:$0xff]
    %v260 = vld [vmem:[#allocation7 + $0x28] sm:$0xff]
    %v261 = vld [vmem:[#allocation7 + $0x30] sm:$0xff]
    %v262 = vld [vmem:[#allocation7 + $0x38] sm:$0xff]
    %v263 = vld [vmem:[#allocation7 + $0x40] sm:$0xff]
    %v264 = vld [vmem:[#allocation7 + $0x48] sm:$0xff]
    %v265 = vld [vmem:[#allocation7 + $0x50] sm:$0xff]
    %v266 = vld [vmem:[#allocation7 + $0x58] sm:$0xff]
    %v267 = vld [vmem:[#allocation7 + $0x60] sm:$0xff]
    %v268 = vld [vmem:[#allocation7 + $0x68] sm:$0xff]
    %v269 = vld [vmem:[#allocation7 + $0x70] sm:$0xff]
    %v270 = vld [vmem:[#allocation7 + $0x78] sm:$0xff]
    %v271 = vld [vmem:[#allocation7 + $0x80] sm:$0xff]
    %v272 = vld [vmem:[#allocation7 + $0x88] sm:$0xff]
    %v273 = vld [vmem:[#allocation7 + $0x90] sm:$0xff]
    %v274 = vld [vmem:[#allocation7 + $0x98] sm:$0xff]
    %v275 = vld [vmem:[#allocation7 + $0xa0] sm:$0xff]
    %v276 = vld [vmem:[#allocation7 + $0xa8] sm:$0xff]
    %v277 = vld [vmem:[#allocation7 + $0xb0] sm:$0xff]
    %v278 = vld [vmem:[#allocation7 + $0xb8] sm:$0xff]
    %v279 = vld [vmem:[#allocation7 + $0xc0] sm:$0xff]
    %v280 = vld [vmem:[#allocation7 + $0xc8] sm:$0xff]
    %v281 = vld [vmem:[#allocation7 + $0xd0] sm:$0xff]
    %v282 = vld [vmem:[#allocation7 + $0xd8] sm:$0xff]
    %v283 = vld [vmem:[#allocation7 + $0xe0] sm:$0xff]
    %v284 = vld [vmem:[#allocation7 + $0xe8] sm:$0xff]
    %v285 = vld [vmem:[#allocation7 + $0xf0] sm:$0xff]
    %v286 = vld [vmem:[#allocation7 + $0xf8] sm:$0xff]
    %v287 = vld [vmem:[%s4] sm:$0x3]
    %v289 = vlaneseq
    %v290 = vshrl.u32 %v289, 7
    %v291 = vsub.s32 0, %v290
    %v292 = vrot.slane %v287, %v291
    %v293 = vlaneseq
    %v294 = vshrl.u32 %v293, 7
    %v295 = vsub.s32 1, %v294
    %v296 = vrot.slane %v287, %v295
    %v331 = vunpack.c.l.b16 %v255
    %v332 = vunpack.c.h.b16 %v255
    %v333 = vunpack.c.l.b16 %v256
    %v334 = vunpack.c.h.b16 %v256
    %v335 = vunpack.c.l.b16 %v257
    %v336 = vunpack.c.h.b16 %v257
    %v337 = vunpack.c.l.b16 %v258
    %v338 = vunpack.c.h.b16 %v258
    %v339 = vunpack.c.l.b16 %v259
    %v340 = vunpack.c.h.b16 %v259
    %v341 = vunpack.c.l.b16 %v260
    %v342 = vunpack.c.h.b16 %v260
    %v343 = vunpack.c.l.b16 %v261
    %v344 = vunpack.c.h.b16 %v261
    %v345 = vunpack.c.l.b16 %v262
    %v346 = vunpack.c.h.b16 %v262
    %v347 = vunpack.c.l.b16 %v263
    %v348 = vunpack.c.h.b16 %v263
    %v349 = vunpack.c.l.b16 %v264
    %v350 = vunpack.c.h.b16 %v264
    %v351 = vunpack.c.l.b16 %v265
    %v352 = vunpack.c.h.b16 %v265
    %v353 = vunpack.c.l.b16 %v266
    %v354 = vunpack.c.h.b16 %v266
    %v355 = vunpack.c.l.b16 %v267
    %v356 = vunpack.c.h.b16 %v267
    %v357 = vunpack.c.l.b16 %v268
    %v358 = vunpack.c.h.b16 %v268
    %v359 = vunpack.c.l.b16 %v269
    %v360 = vunpack.c.h.b16 %v269
    %v361 = vunpack.c.l.b16 %v270
    %v362 = vunpack.c.h.b16 %v270
    %v363 = vunpack.c.l.b16 %v271
    %v364 = vunpack.c.h.b16 %v271
    %v365 = vunpack.c.l.b16 %v272
    %v366 = vunpack.c.h.b16 %v272
    %v367 = vunpack.c.l.b16 %v273
    %v368 = vunpack.c.h.b16 %v273
    %v369 = vunpack.c.l.b16 %v274
    %v370 = vunpack.c.h.b16 %v274
    %v371 = vunpack.c.l.b16 %v275
    %v372 = vunpack.c.h.b16 %v275
    %v373 = vunpack.c.l.b16 %v276
    %v374 = vunpack.c.h.b16 %v276
    %v375 = vunpack.c.l.b16 %v277
    %v376 = vunpack.c.h.b16 %v277
    %v377 = vunpack.c.l.b16 %v278
    %v378 = vunpack.c.h.b16 %v278
    %v379 = vunpack.c.l.b16 %v279
    %v380 = vunpack.c.h.b16 %v279
    %v381 = vunpack.c.l.b16 %v280
    %v382 = vunpack.c.h.b16 %v280
    %v383 = vunpack.c.l.b16 %v281
    %v384 = vunpack.c.h.b16 %v281
    %v385 = vunpack.c.l.b16 %v282
    %v386 = vunpack.c.h.b16 %v282
    %v387 = vunpack.c.l.b16 %v283
    %v388 = vunpack.c.h.b16 %v283
    %v389 = vunpack.c.l.b16 %v284
    %v390 = vunpack.c.h.b16 %v284
    %v391 = vunpack.c.l.b16 %v285
    %v392 = vunpack.c.h.b16 %v285
    %v393 = vunpack.c.l.b16 %v286
    %v394 = vunpack.c.h.b16 %v286
    %v395 = vpack.c.b16 %v333, %v331
    %v396 = vpack.c.b16 %v334, %v332
    %v397 = vpack.c.b16 %v337, %v335
    %v398 = vpack.c.b16 %v338, %v336
    %v399 = vpack.c.b16 %v341, %v339
    %v400 = vpack.c.b16 %v342, %v340
    %v401 = vpack.c.b16 %v345, %v343
    %v402 = vpack.c.b16 %v346, %v344
    %v403 = vpack.c.b16 %v349, %v347
    %v404 = vpack.c.b16 %v350, %v348
    %v405 = vpack.c.b16 %v353, %v351
    %v406 = vpack.c.b16 %v354, %v352
    %v407 = vpack.c.b16 %v357, %v355
    %v408 = vpack.c.b16 %v358, %v356
    %v409 = vpack.c.b16 %v361, %v359
    %v410 = vpack.c.b16 %v362, %v360
    %v411 = vpack.c.b16 %v365, %v363
    %v412 = vpack.c.b16 %v366, %v364
    %v413 = vpack.c.b16 %v369, %v367
    %v414 = vpack.c.b16 %v370, %v368
    %v415 = vpack.c.b16 %v373, %v371
    %v416 = vpack.c.b16 %v374, %v372
    %v417 = vpack.c.b16 %v377, %v375
    %v418 = vpack.c.b16 %v378, %v376
    %v419 = vpack.c.b16 %v381, %v379
    %v420 = vpack.c.b16 %v382, %v380
    %v421 = vpack.c.b16 %v385, %v383
    %v422 = vpack.c.b16 %v386, %v384
    %v423 = vpack.c.b16 %v389, %v387
    %v424 = vpack.c.b16 %v390, %v388
    %v425 = vpack.c.b16 %v393, %v391
    %v426 = vpack.c.b16 %v394, %v392
    %459 = vmatprep.subr.bf16.mxu0 %v396
    %460 = vmatpush1.bf16.msra.mxu0 %v395
    %461 = vmatprep.subr.bf16.mxu0 %v398
    %462 = vmatpush1.bf16.msra.mxu0 %v397
    %463 = vmatprep.subr.bf16.mxu0 %v400
    %464 = vmatpush1.bf16.msra.mxu0 %v399
    %465 = vmatprep.subr.bf16.mxu0 %v402
    %466 = vmatpush1.bf16.msra.mxu0 %v401
    %467 = vmatprep.subr.bf16.mxu0 %v404
    %468 = vmatpush1.bf16.msra.mxu0 %v403
    %469 = vmatprep.subr.bf16.mxu0 %v406
    %470 = vmatpush1.bf16.msra.mxu0 %v405
    %471 = vmatprep.subr.bf16.mxu0 %v408
    %472 = vmatpush1.bf16.msra.mxu0 %v407
    %473 = vmatprep.subr.bf16.mxu0 %v410
    %474 = vmatpush1.bf16.msra.mxu0 %v409
    %475 = vmatprep.subr.bf16.mxu0 %v412
    %476 = vmatpush1.bf16.msra.mxu0 %v411
    %477 = vmatprep.subr.bf16.mxu0 %v414
    %478 = vmatpush1.bf16.msra.mxu0 %v413
    %479 = vmatprep.subr.bf16.mxu0 %v416
    %480 = vmatpush1.bf16.msra.mxu0 %v415
    %481 = vmatprep.subr.bf16.mxu0 %v418
    %482 = vmatpush1.bf16.msra.mxu0 %v417
    %483 = vmatprep.subr.bf16.mxu0 %v420
    %484 = vmatpush1.bf16.msra.mxu0 %v419
    %485 = vmatprep.subr.bf16.mxu0 %v422
    %486 = vmatpush1.bf16.msra.mxu0 %v421
    %487 = vmatprep.subr.bf16.mxu0 %v424
    %488 = vmatpush1.bf16.msra.mxu0 %v423
    %489 = vmatprep.subr.bf16.mxu0 %v426
    %490 = vmatpush1.bf16.msra.mxu0 %v425
    %491 = vmatprep.mubr.bf16.mxu0 %v254
    %492 = vmatmul.mubr.bf16.gmra.mrb[0].mxu0 %v253
    %v493 = vpop.f32.mrb[0].mxu0
    %v494 = vadd.f32 %v292, %v493
    %v495 = vpop.f32.mrb[0].mxu0
    %v496 = vadd.f32 %v296, %v495
    %v497 = vpop.f32.mrb[0].mxu0
    %v498 = vpop.f32.mrb[0].mxu0
    %499 = vdwg.mxu0
    %v500 = vtanh.pop %v494
    %v501 = vtanh.pop %v496
    %v502 = vpack.c.bf16 %v500, %v500
    %v503 = vpack.c.bf16 %v501, %v501
    %v504 = vld [vmem:[#allocation8] sm:$0xff]
    %v505 = vld [vmem:[#allocation8 + $0x8] sm:$0xff]
    %v506 = vld [vmem:[#allocation8 + $0x10] sm:$0xff]
    %v507 = vld [vmem:[#allocation8 + $0x18] sm:$0xff]
    %v508 = vld [vmem:[#allocation8 + $0x20] sm:$0xff]
    %v509 = vld [vmem:[#allocation8 + $0x28] sm:$0xff]
    %v510 = vld [vmem:[#allocation8 + $0x30] sm:$0xff]
    %v511 = vld [vmem:[#allocation8 + $0x38] sm:$0xff]
    %v512 = vld [vmem:[#allocation8 + $0x40] sm:$0xff]
    %v513 = vld [vmem:[#allocation8 + $0x48] sm:$0xff]
    %v514 = vld [vmem:[#allocation8 + $0x50] sm:$0xff]
    %v515 = vld [vmem:[#allocation8 + $0x58] sm:$0xff]
    %v516 = vld [vmem:[#allocation8 + $0x60] sm:$0xff]
    %v517 = vld [vmem:[#allocation8 + $0x68] sm:$0xff]
    %v518 = vld [vmem:[#allocation8 + $0x70] sm:$0xff]
    %v519 = vld [vmem:[#allocation8 + $0x78] sm:$0xff]
    %v520 = vld [vmem:[#allocation8 + $0x80] sm:$0xff]
    %v521 = vld [vmem:[#allocation8 + $0x88] sm:$0xff]
    %v522 = vld [vmem:[#allocation8 + $0x90] sm:$0xff]
    %v523 = vld [vmem:[#allocation8 + $0x98] sm:$0xff]
    %v524 = vld [vmem:[#allocation8 + $0xa0] sm:$0xff]
    %v525 = vld [vmem:[#allocation8 + $0xa8] sm:$0xff]
    %v526 = vld [vmem:[#allocation8 + $0xb0] sm:$0xff]
    %v527 = vld [vmem:[#allocation8 + $0xb8] sm:$0xff]
    %v528 = vld [vmem:[#allocation8 + $0xc0] sm:$0xff]
    %v529 = vld [vmem:[#allocation8 + $0xc8] sm:$0xff]
    %v530 = vld [vmem:[#allocation8 + $0xd0] sm:$0xff]
    %v531 = vld [vmem:[#allocation8 + $0xd8] sm:$0xff]
    %v532 = vld [vmem:[#allocation8 + $0xe0] sm:$0xff]
    %v533 = vld [vmem:[#allocation8 + $0xe8] sm:$0xff]
    %v534 = vld [vmem:[#allocation8 + $0xf0] sm:$0xff]
    %v535 = vld [vmem:[#allocation8 + $0xf8] sm:$0xff]
    %v536 = vld [vmem:[%s6] sm:$0x3]
    %v538 = vlaneseq
    %v539 = vshrl.u32 %v538, 7
    %v540 = vsub.s32 0, %v539
    %v541 = vrot.slane %v536, %v540
    %v542 = vlaneseq
    %v543 = vshrl.u32 %v542, 7
    %v544 = vsub.s32 1, %v543
    %v545 = vrot.slane %v536, %v544
    %v580 = vunpack.c.l.b16 %v504
    %v581 = vunpack.c.h.b16 %v504
    %v582 = vunpack.c.l.b16 %v505
    %v583 = vunpack.c.h.b16 %v505
    %v584 = vunpack.c.l.b16 %v506
    %v585 = vunpack.c.h.b16 %v506
    %v586 = vunpack.c.l.b16 %v507
    %v587 = vunpack.c.h.b16 %v507
    %v588 = vunpack.c.l.b16 %v508
    %v589 = vunpack.c.h.b16 %v508
    %v590 = vunpack.c.l.b16 %v509
    %v591 = vunpack.c.h.b16 %v509
    %v592 = vunpack.c.l.b16 %v510
    %v593 = vunpack.c.h.b16 %v510
    %v594 = vunpack.c.l.b16 %v511
    %v595 = vunpack.c.h.b16 %v511
    %v596 = vunpack.c.l.b16 %v512
    %v597 = vunpack.c.h.b16 %v512
    %v598 = vunpack.c.l.b16 %v513
    %v599 = vunpack.c.h.b16 %v513
    %v600 = vunpack.c.l.b16 %v514
    %v601 = vunpack.c.h.b16 %v514
    %v602 = vunpack.c.l.b16 %v515
    %v603 = vunpack.c.h.b16 %v515
    %v604 = vunpack.c.l.b16 %v516
    %v605 = vunpack.c.h.b16 %v516
    %v606 = vunpack.c.l.b16 %v517
    %v607 = vunpack.c.h.b16 %v517
    %v608 = vunpack.c.l.b16 %v518
    %v609 = vunpack.c.h.b16 %v518
    %v610 = vunpack.c.l.b16 %v519
    %v611 = vunpack.c.h.b16 %v519
    %v612 = vunpack.c.l.b16 %v520
    %v613 = vunpack.c.h.b16 %v520
    %v614 = vunpack.c.l.b16 %v521
    %v615 = vunpack.c.h.b16 %v521
    %v616 = vunpack.c.l.b16 %v522
    %v617 = vunpack.c.h.b16 %v522
    %v618 = vunpack.c.l.b16 %v523
    %v619 = vunpack.c.h.b16 %v523
    %v620 = vunpack.c.l.b16 %v524
    %v621 = vunpack.c.h.b16 %v524
    %v622 = vunpack.c.l.b16 %v525
    %v623 = vunpack.c.h.b16 %v525
    %v624 = vunpack.c.l.b16 %v526
    %v625 = vunpack.c.h.b16 %v526
    %v626 = vunpack.c.l.b16 %v527
    %v627 = vunpack.c.h.b16 %v527
    %v628 = vunpack.c.l.b16 %v528
    %v629 = vunpack.c.h.b16 %v528
    %v630 = vunpack.c.l.b16 %v529
    %v631 = vunpack.c.h.b16 %v529
    %v632 = vunpack.c.l.b16 %v530
    %v633 = vunpack.c.h.b16 %v530
    %v634 = vunpack.c.l.b16 %v531
    %v635 = vunpack.c.h.b16 %v531
    %v636 = vunpack.c.l.b16 %v532
    %v637 = vunpack.c.h.b16 %v532
    %v638 = vunpack.c.l.b16 %v533
    %v639 = vunpack.c.h.b16 %v533
    %v640 = vunpack.c.l.b16 %v534
    %v641 = vunpack.c.h.b16 %v534
    %v642 = vunpack.c.l.b16 %v535
    %v643 = vunpack.c.h.b16 %v535
    %v644 = vpack.c.b16 %v582, %v580
    %v645 = vpack.c.b16 %v583, %v581
    %v646 = vpack.c.b16 %v586, %v584
    %v647 = vpack.c.b16 %v587, %v585
    %v648 = vpack.c.b16 %v590, %v588
    %v649 = vpack.c.b16 %v591, %v589
    %v650 = vpack.c.b16 %v594, %v592
    %v651 = vpack.c.b16 %v595, %v593
    %v652 = vpack.c.b16 %v598, %v596
    %v653 = vpack.c.b16 %v599, %v597
    %v654 = vpack.c.b16 %v602, %v600
    %v655 = vpack.c.b16 %v603, %v601
    %v656 = vpack.c.b16 %v606, %v604
    %v657 = vpack.c.b16 %v607, %v605
    %v658 = vpack.c.b16 %v610, %v608
    %v659 = vpack.c.b16 %v611, %v609
    %v660 = vpack.c.b16 %v614, %v612
    %v661 = vpack.c.b16 %v615, %v613
    %v662 = vpack.c.b16 %v618, %v616
    %v663 = vpack.c.b16 %v619, %v617
    %v664 = vpack.c.b16 %v622, %v620
    %v665 = vpack.c.b16 %v623, %v621
    %v666 = vpack.c.b16 %v626, %v624
    %v667 = vpack.c.b16 %v627, %v625
    %v668 = vpack.c.b16 %v630, %v628
    %v669 = vpack.c.b16 %v631, %v629
    %v670 = vpack.c.b16 %v634, %v632
    %v671 = vpack.c.b16 %v635, %v633
    %v672 = vpack.c.b16 %v638, %v636
    %v673 = vpack.c.b16 %v639, %v637
    %v674 = vpack.c.b16 %v642, %v640
    %v675 = vpack.c.b16 %v643, %v641
    %708 = vmatprep.subr.bf16.mxu0 %v645
    %709 = vmatpush1.bf16.msra.mxu0 %v644
    %710 = vmatprep.subr.bf16.mxu0 %v647
    %711 = vmatpush1.bf16.msra.mxu0 %v646
    %712 = vmatprep.subr.bf16.mxu0 %v649
    %713 = vmatpush1.bf16.msra.mxu0 %v648
    %714 = vmatprep.subr.bf16.mxu0 %v651
    %715 = vmatpush1.bf16.msra.mxu0 %v650
    %716 = vmatprep.subr.bf16.mxu0 %v653
    %717 = vmatpush1.bf16.msra.mxu0 %v652
    %718 = vmatprep.subr.bf16.mxu0 %v655
    %719 = vmatpush1.bf16.msra.mxu0 %v654
    %720 = vmatprep.subr.bf16.mxu0 %v657
    %721 = vmatpush1.bf16.msra.mxu0 %v656
    %722 = vmatprep.subr.bf16.mxu0 %v659
    %723 = vmatpush1.bf16.msra.mxu0 %v658
    %724 = vmatprep.subr.bf16.mxu0 %v661
    %725 = vmatpush1.bf16.msra.mxu0 %v660
    %726 = vmatprep.subr.bf16.mxu0 %v663
    %727 = vmatpush1.bf16.msra.mxu0 %v662
    %728 = vmatprep.subr.bf16.mxu0 %v665
    %729 = vmatpush1.bf16.msra.mxu0 %v664
    %730 = vmatprep.subr.bf16.mxu0 %v667
    %731 = vmatpush1.bf16.msra.mxu0 %v666
    %732 = vmatprep.subr.bf16.mxu0 %v669
    %733 = vmatpush1.bf16.msra.mxu0 %v668
    %734 = vmatprep.subr.bf16.mxu0 %v671
    %735 = vmatpush1.bf16.msra.mxu0 %v670
    %736 = vmatprep.subr.bf16.mxu0 %v673
    %737 = vmatpush1.bf16.msra.mxu0 %v672
    %738 = vmatprep.subr.bf16.mxu0 %v675
    %739 = vmatpush1.bf16.msra.mxu0 %v674
    %740 = vmatprep.mubr.bf16.mxu0 %v503
    %741 = vmatmul.mubr.bf16.gmra.mrb[0].mxu0 %v502
    %v742 = vpop.f32.mrb[0].mxu0
    %v743 = vadd.f32 %v541, %v742
    %v744 = vpop.f32.mrb[0].mxu0
    %v745 = vadd.f32 %v545, %v744
    %v746 = vpop.f32.mrb[0].mxu0
    %v747 = vpop.f32.mrb[0].mxu0
    %748 = vdwg.mxu0
    %v749 = vtanh.pop %v743
    %v750 = vtanh.pop %v745
    %v751 = vpack.c.bf16 %v749, %v749
    %v752 = vpack.c.bf16 %v750, %v750
    %v753 = vld [vmem:[#allocation10] sm:$0xff]
    %v754 = vld [vmem:[#allocation10 + $0x8] sm:$0xff]
    %v755 = vld [vmem:[#allocation10 + $0x10] sm:$0xff]
    %v756 = vld [vmem:[#allocation10 + $0x18] sm:$0xff]
    %v757 = vld [vmem:[#allocation10 + $0x20] sm:$0xff]
    %v758 = vld [vmem:[#allocation10 + $0x28] sm:$0xff]
    %v759 = vld [vmem:[#allocation10 + $0x30] sm:$0xff]
    %v760 = vld [vmem:[#allocation10 + $0x38] sm:$0xff]
    %v761 = vld [vmem:[#allocation10 + $0x40] sm:$0xff]
    %v762 = vld [vmem:[#allocation10 + $0x48] sm:$0xff]
    %v763 = vld [vmem:[#allocation10 + $0x50] sm:$0xff]
    %v764 = vld [vmem:[#allocation10 + $0x58] sm:$0xff]
    %v765 = vld [vmem:[#allocation10 + $0x60] sm:$0xff]
    %v766 = vld [vmem:[#allocation10 + $0x68] sm:$0xff]
    %v767 = vld [vmem:[#allocation10 + $0x70] sm:$0xff]
    %v768 = vld [vmem:[#allocation10 + $0x78] sm:$0xff]
    %v769 = vld [vmem:[#allocation10 + $0x80] sm:$0xff]
    %v770 = vld [vmem:[#allocation10 + $0x88] sm:$0xff]
    %v771 = vld [vmem:[#allocation10 + $0x90] sm:$0xff]
    %v772 = vld [vmem:[#allocation10 + $0x98] sm:$0xff]
    %v773 = vld [vmem:[#allocation10 + $0xa0] sm:$0xff]
    %v774 = vld [vmem:[#allocation10 + $0xa8] sm:$0xff]
    %v775 = vld [vmem:[#allocation10 + $0xb0] sm:$0xff]
    %v776 = vld [vmem:[#allocation10 + $0xb8] sm:$0xff]
    %v777 = vld [vmem:[#allocation10 + $0xc0] sm:$0xff]
    %v778 = vld [vmem:[#allocation10 + $0xc8] sm:$0xff]
    %v779 = vld [vmem:[#allocation10 + $0xd0] sm:$0xff]
    %v780 = vld [vmem:[#allocation10 + $0xd8] sm:$0xff]
    %v781 = vld [vmem:[#allocation10 + $0xe0] sm:$0xff]
    %v782 = vld [vmem:[#allocation10 + $0xe8] sm:$0xff]
    %v783 = vld [vmem:[#allocation10 + $0xf0] sm:$0xff]
    %v784 = vld [vmem:[#allocation10 + $0xf8] sm:$0xff]
    %v785 = vld [vmem:[%s8] sm:$0x3]
    %v787 = vlaneseq
    %v788 = vshrl.u32 %v787, 7
    %v789 = vsub.s32 0, %v788
    %v790 = vrot.slane %v785, %v789
    %v791 = vlaneseq
    %v792 = vshrl.u32 %v791, 7
    %v793 = vsub.s32 1, %v792
    %v794 = vrot.slane %v785, %v793
    %v829 = vunpack.c.l.b16 %v753
    %v830 = vunpack.c.h.b16 %v753
    %v831 = vunpack.c.l.b16 %v754
    %v832 = vunpack.c.h.b16 %v754
    %v833 = vunpack.c.l.b16 %v755
    %v834 = vunpack.c.h.b16 %v755
    %v835 = vunpack.c.l.b16 %v756
    %v836 = vunpack.c.h.b16 %v756
    %v837 = vunpack.c.l.b16 %v757
    %v838 = vunpack.c.h.b16 %v757
    %v839 = vunpack.c.l.b16 %v758
    %v840 = vunpack.c.h.b16 %v758
    %v841 = vunpack.c.l.b16 %v759
    %v842 = vunpack.c.h.b16 %v759
    %v843 = vunpack.c.l.b16 %v760
    %v844 = vunpack.c.h.b16 %v760
    %v845 = vunpack.c.l.b16 %v761
    %v846 = vunpack.c.h.b16 %v761
    %v847 = vunpack.c.l.b16 %v762
    %v848 = vunpack.c.h.b16 %v762
    %v849 = vunpack.c.l.b16 %v763
    %v850 = vunpack.c.h.b16 %v763
    %v851 = vunpack.c.l.b16 %v764
    %v852 = vunpack.c.h.b16 %v764
    %v853 = vunpack.c.l.b16 %v765
    %v854 = vunpack.c.h.b16 %v765
    %v855 = vunpack.c.l.b16 %v766
    %v856 = vunpack.c.h.b16 %v766
    %v857 = vunpack.c.l.b16 %v767
    %v858 = vunpack.c.h.b16 %v767
    %v859 = vunpack.c.l.b16 %v768
    %v860 = vunpack.c.h.b16 %v768
    %v861 = vunpack.c.l.b16 %v769
    %v862 = vunpack.c.h.b16 %v769
    %v863 = vunpack.c.l.b16 %v770
    %v864 = vunpack.c.h.b16 %v770
    %v865 = vunpack.c.l.b16 %v771
    %v866 = vunpack.c.h.b16 %v771
    %v867 = vunpack.c.l.b16 %v772
    %v868 = vunpack.c.h.b16 %v772
    %v869 = vunpack.c.l.b16 %v773
    %v870 = vunpack.c.h.b16 %v773
    %v871 = vunpack.c.l.b16 %v774
    %v872 = vunpack.c.h.b16 %v774
    %v873 = vunpack.c.l.b16 %v775
    %v874 = vunpack.c.h.b16 %v775
    %v875 = vunpack.c.l.b16 %v776
    %v876 = vunpack.c.h.b16 %v776
    %v877 = vunpack.c.l.b16 %v777
    %v878 = vunpack.c.h.b16 %v777
    %v879 = vunpack.c.l.b16 %v778
    %v880 = vunpack.c.h.b16 %v778
    %v881 = vunpack.c.l.b16 %v779
    %v882 = vunpack.c.h.b16 %v779
    %v883 = vunpack.c.l.b16 %v780
    %v884 = vunpack.c.h.b16 %v780
    %v885 = vunpack.c.l.b16 %v781
    %v886 = vunpack.c.h.b16 %v781
    %v887 = vunpack.c.l.b16 %v782
    %v888 = vunpack.c.h.b16 %v782
    %v889 = vunpack.c.l.b16 %v783
    %v890 = vunpack.c.h.b16 %v783
    %v891 = vunpack.c.l.b16 %v784
    %v892 = vunpack.c.h.b16 %v784
    %v893 = vpack.c.b16 %v831, %v829
    %v894 = vpack.c.b16 %v832, %v830
    %v895 = vpack.c.b16 %v835, %v833
    %v896 = vpack.c.b16 %v836, %v834
    %v897 = vpack.c.b16 %v839, %v837
    %v898 = vpack.c.b16 %v840, %v838
    %v899 = vpack.c.b16 %v843, %v841
    %v900 = vpack.c.b16 %v844, %v842
    %v901 = vpack.c.b16 %v847, %v845
    %v902 = vpack.c.b16 %v848, %v846
    %v903 = vpack.c.b16 %v851, %v849
    %v904 = vpack.c.b16 %v852, %v850
    %v905 = vpack.c.b16 %v855, %v853
    %v906 = vpack.c.b16 %v856, %v854
    %v907 = vpack.c.b16 %v859, %v857
    %v908 = vpack.c.b16 %v860, %v858
    %v909 = vpack.c.b16 %v863, %v861
    %v910 = vpack.c.b16 %v864, %v862
    %v911 = vpack.c.b16 %v867, %v865
    %v912 = vpack.c.b16 %v868, %v866
    %v913 = vpack.c.b16 %v871, %v869
    %v914 = vpack.c.b16 %v872, %v870
    %v915 = vpack.c.b16 %v875, %v873
    %v916 = vpack.c.b16 %v876, %v874
    %v917 = vpack.c.b16 %v879, %v877
    %v918 = vpack.c.b16 %v880, %v878
    %v919 = vpack.c.b16 %v883, %v881
    %v920 = vpack.c.b16 %v884, %v882
    %v921 = vpack.c.b16 %v887, %v885
    %v922 = vpack.c.b16 %v888, %v886
    %v923 = vpack.c.b16 %v891, %v889
    %v924 = vpack.c.b16 %v892, %v890
    %957 = vmatprep.subr.bf16.mxu0 %v894
    %958 = vmatpush1.bf16.msra.mxu0 %v893
    %959 = vmatprep.subr.bf16.mxu0 %v896
    %960 = vmatpush1.bf16.msra.mxu0 %v895
    %961 = vmatprep.subr.bf16.mxu0 %v898
    %962 = vmatpush1.bf16.msra.mxu0 %v897
    %963 = vmatprep.subr.bf16.mxu0 %v900
    %964 = vmatpush1.bf16.msra.mxu0 %v899
    %965 = vmatprep.subr.bf16.mxu0 %v902
    %966 = vmatpush1.bf16.msra.mxu0 %v901
    %967 = vmatprep.subr.bf16.mxu0 %v904
    %968 = vmatpush1.bf16.msra.mxu0 %v903
    %969 = vmatprep.subr.bf16.mxu0 %v906
    %970 = vmatpush1.bf16.msra.mxu0 %v905
    %971 = vmatprep.subr.bf16.mxu0 %v908
    %972 = vmatpush1.bf16.msra.mxu0 %v907
    %973 = vmatprep.subr.bf16.mxu0 %v910
    %974 = vmatpush1.bf16.msra.mxu0 %v909
    %975 = vmatprep.subr.bf16.mxu0 %v912
    %976 = vmatpush1.bf16.msra.mxu0 %v911
    %977 = vmatprep.subr.bf16.mxu0 %v914
    %978 = vmatpush1.bf16.msra.mxu0 %v913
    %979 = vmatprep.subr.bf16.mxu0 %v916
    %980 = vmatpush1.bf16.msra.mxu0 %v915
    %981 = vmatprep.subr.bf16.mxu0 %v918
    %982 = vmatpush1.bf16.msra.mxu0 %v917
    %983 = vmatprep.subr.bf16.mxu0 %v920
    %984 = vmatpush1.bf16.msra.mxu0 %v919
    %985 = vmatprep.subr.bf16.mxu0 %v922
    %986 = vmatpush1.bf16.msra.mxu0 %v921
    %987 = vmatprep.subr.bf16.mxu0 %v924
    %988 = vmatpush1.bf16.msra.mxu0 %v923
    %989 = vmatprep.mubr.bf16.mxu0 %v752
    %990 = vmatmul.mubr.bf16.gmra.mrb[0].mxu0 %v751
    %v991 = vpop.f32.mrb[0].mxu0
    %v992 = vadd.f32 %v790, %v991
    %v993 = vpop.f32.mrb[0].mxu0
    %v994 = vadd.f32 %v794, %v993
    %v995 = vpop.f32.mrb[0].mxu0
    %v996 = vpop.f32.mrb[0].mxu0
    %997 = vdwg.mxu0
    %v998 = vtanh.pop %v992
    %v999 = vtanh.pop %v994
    %vm1000 = vcmask 123904
    %1001 = vst.msk [vmem:[#allocation11] sm:$0x3] %vm1000, %v100
    %v1004 = vunpack.c.l.s4 1983009808
    %v1005 = vunpack.c.0.s8 %v1004
    %v1006 = vlaneseq
    %v1007 = vshrl.u32 %v1006, 7
    %v1008 = vsub.s32 %v1005, %v1007
    %v1009 = vrot.slane %v998, %v1008
    %1010 = vrot.lane.b32.xlu0 %v1009, 16
    %v1011 = vpop.permute.xlu0 %1010
    %vm1013 = vcmask 386176
    %1014 = vst.msk [vmem:[#allocation11] sm:$0x3] %vm1013, %v1011
    %v1017 = vunpack.c.l.s4 1983009808
    %v1018 = vunpack.c.0.s8 %v1017
    %v1019 = vlaneseq
    %v1020 = vshrl.u32 %v1019, 7
    %v1021 = vsub.s32 %v1018, %v1020
    %v1022 = vrot.slane %v100, %v1021
    %1023 = vrot.lane.b32.xlu0 %v1022, 32
    %v1024 = vpop.permute.xlu0 %1023
    %vm1026 = vcmask 517504
    %1027 = vst.msk [vmem:[#allocation11] sm:$0x3] %vm1026, %v1024
    %1028 = vrot.lane.b32.xlu0 %v1009, 32
    %v1029 = vpop.permute.xlu0 %1028
    %vm1031 = vcmask 779776
    %1032 = vst.msk [vmem:[#allocation11] sm:$0x3] %vm1031, %v1029
    %1033 = vrot.lane.b32.xlu0 %v1022, 64
    %v1034 = vpop.permute.xlu0 %1033
    %vm1036 = vcmask 911104
    %1037 = vst.msk [vmem:[#allocation11] sm:$0x3] %vm1036, %v1034
    %1038 = vrot.lane.b32.xlu0 %v1009, 48
    %v1039 = vpop.permute.xlu0 %1038
    %v1040 = vrot.slane %v1039, 6
    %vm1041 = vcmask 392192
    %v1042 = vsel %vm1041, %v1040, %v1039
    %vm1044 = vcmask 1042304
    %vm1045 = vcmask 125954
    %vm1046 = vmor %vm1045, %vm1044
    %1047 = vst.msk [vmem:[#allocation11] sm:$0xf] %vm1046, %v1042
    %1048 = vrot.lane.b32.xlu0 %v1022, 96
    %v1049 = vpop.permute.xlu0 %1048
    %vm1051 = vcmask 255104
    %1052 = vst.msk [vmem:[#allocation11 + $0x2] sm:$0x3] %vm1051, %v1049
    %1053 = vrot.lane.b32.xlu0 %v1009, 64
    %v1054 = vpop.permute.xlu0 %1053
    %vm1056 = vcmask 517376
    %1057 = vst.msk [vmem:[#allocation11 + $0x2] sm:$0x3] %vm1056, %v1054
    %vm1058 = vcmask 648704
    %1059 = vst.msk [vmem:[#allocation11 + $0x2] sm:$0x3] %vm1058, %v100
    %v1062 = vunpack.c.l.s4 1983009808
    %v1063 = vunpack.c.0.s8 %v1062
    %v1064 = vlaneseq
    %v1065 = vshrl.u32 %v1064, 7
    %v1066 = vsub.s32 %v1063, %v1065
    %v1067 = vrot.slane %v999, %v1066
    %1068 = vrot.lane.b32.xlu0 %v1067, 80
    %v1069 = vpop.permute.xlu0 %1068
    %vm1071 = vcmask 910976
    %1072 = vst.msk [vmem:[#allocation11 + $0x2] sm:$0x3] %vm1071, %v1069
    %1073 = vst.msk [vmem:[#allocation11 + $0x2] sm:$0x3] %vm1044, %v1024
    %1074 = vrot.lane.b32.xlu0 %v1067, 96
    %v1075 = vpop.permute.xlu0 %1074
    %vm1077 = vcmask 254976
    %1078 = vst.msk [vmem:[#allocation11 + $0x4] sm:$0x3] %vm1077, %v1075
    %vm1079 = vcmask 386304
    %1080 = vst.msk [vmem:[#allocation11 + $0x4] sm:$0x3] %vm1079, %v1034
    %1081 = vrot.lane.b32.xlu0 %v1067, 112
    %v1082 = vpop.permute.xlu0 %1081
    %vm1084 = vcmask 648576
    %1085 = vst.msk [vmem:[#allocation11 + $0x4] sm:$0x3] %vm1084, %v1082
    %vm1086 = vcmask 779904
    %1087 = vst.msk [vmem:[#allocation11 + $0x4] sm:$0x3] %vm1086, %v1049
    %vm1088 = vcmask 1042176
    %1089 = vst.msk [vmem:[#allocation11 + $0x4] sm:$0x3] %vm1088, %v999
    // Predicated region
    $region58: #{tpu_custom_call.1} parent=1 // pred_check
      _
    $region59: #{tpu_custom_call.1} parent=1 // pred_check_branch
      %1091 = sbr.rel (0) target = $region61
    $region60: #{tpu_custom_call.1} parent=1 // pred_region
      %s1093 = ssub.s32 96, 96
      %1094 = vsyncadd [#allocation4], %s1093
      %s1096 = sshll.u32 [#allocation11], 4
      %s1097 = int_to_ptr.vmem [resolvable:$true] %s1096
      %1099 = dma.vmem_to_hbm [thread:$0]  %s1097, 96, %s9, [#allocation4]
    $region61: #{tpu_custom_call.1} parent=1 // pred_fallthru
      _
    // Predicated region
    $region62: #{tpu_custom_call.1} parent=1 // pred_check
      _
    $region63: #{tpu_custom_call.1} parent=1 // pred_check_branch
      %1101 = sbr.rel (0) target = $region65
    $region64: #{tpu_custom_call.1} parent=1 // pred_region
      %1102 = dma.done [#allocation4], 96
    $region65: #{tpu_custom_call.1} parent=1 // pred_fallthru
      _
    %1103 = vsyncpa [#allocation3], 1
    %1104 = vsyncpa [#allocation6], 1
    %1105 = vsyncpa [#allocation9], 1
    %1106 = vsyncpa [#allocation4], 1

</llo_original>
